<compile_context>
chip_gen: v5e
topology: v5e:2x2
jax: 0.10.0
libtpu: 0.0.40
codegen_flags: <defaults>
</compile_context>

<pallas_src>
import functools

import jax
import jax.numpy as jnp
from jax.experimental import pallas as pl
from jax.experimental.pallas import tpu as pltpu

IN_F = 2                  # input features
H1, H2 = 50, 20           # hidden sizes
H1P, H2P = 64, 32         # sublane-aligned padded hidden sizes
SLAB_ROWS = H1P + H2P     # 96  (rows 0:64 = layer-1 params, rows 64:96 = rest)
SLAB_COLS = 128           # one lane tile


def _cdiv(a, b):
    return -(-a // b)


def _round_up(x, m):
    return _cdiv(x, m) * m


# ---------------------------------------------------------------------------
# Kernel
# ---------------------------------------------------------------------------
def _mlp_kernel(x_ref, w_ref, o_ref, *, chunk, n_chunks):
    """Batch-on-lanes fused MLP.

    x_ref : (2, TB)        input tile, batch on the lane axis
    w_ref : (96, 128)      packed weight slab (VMEM-resident across the grid)
    o_ref : (1, TB)        lane-dense output tile

    Slab layout (f32, zero padded):
      [0:64,  0:2]  w1^T      [0:64,  2:3]  b1
      [64:96, 0:64] w2^T      [64:96, 64:65] b2
      [64:96, 65:66] w3       [64:65, 66:67] b3
    """
    # One-time (per grid step) weight loads from the packed slab.
    w1c0 = w_ref[0:H1P, 0:1]                       # (64, 1)
    w1c1 = w_ref[0:H1P, 1:2]                       # (64, 1)
    b1 = w_ref[0:H1P, 2:3]                         # (64, 1)
    w2 = w_ref[H1P:H1P + H2P, 0:H1P]               # (32, 64)
    b2 = w_ref[H1P:H1P + H2P, H1P:H1P + 1]         # (32, 1)
    w3 = w_ref[H1P:H1P + H2P, H1P + 1:H1P + 2]     # (32, 1)
    b3 = w_ref[H1P:H1P + 1, H1P + 2:H1P + 3]       # (1, 1)

    # Fully unrolled chunk loop over the lane (batch) axis with static,
    # 128-aligned offsets: bounds h1/h2 live ranges to one chunk (no VMEM
    # spills) while keeping TB large at the grid level.
    for c in range(n_chunks):
        lo = c * chunk                             # static multiple of 128
        x0 = x_ref[0:1, lo:lo + chunk]             # (1, chunk)
        x1 = x_ref[1:2, lo:lo + chunk]             # (1, chunk)

        # Layer 1 (K=2): two broadcast FMAs on the VPU (no MXU round trip).
        h1 = jnp.maximum(w1c0 * x0 + w1c1 * x1 + b1, 0.0)          # (64, chunk)

        # Layer 2 (50 -> 20): the only matmul worth the MXU; f32 accumulate.
        h2 = jnp.dot(w2, h1, preferred_element_type=jnp.float32)    # (32, chunk)
        h2 = jnp.maximum(h2 + b2, 0.0)

        # Layer 3 (N=1): VPU multiply + sublane (XLU) reduction.
        oc = jnp.sum(w3 * h2, axis=0, keepdims=True) + b3           # (1, chunk)
        o_ref[:, lo:lo + chunk] = oc.astype(o_ref.dtype)             # lane-dense store


# ---------------------------------------------------------------------------
# Parameter packing (one-time, host side)
# ---------------------------------------------------------------------------
def pack_params(params):
    """Pack all 6 weight/bias tensors into one (96, 128) f32 slab."""
    w1, b1, w2, b2, w3, b3 = params        # (2,50)(1,50)(50,20)(1,20)(20,1)(1,1)
    slab = jnp.zeros((SLAB_ROWS, SLAB_COLS), jnp.float32)
    slab = slab.at[:H1, 0:2].set(w1.T)                       # w1^T  (50, 2)
    slab = slab.at[:H1, 2:3].set(b1.T)                       # b1    (50, 1)
    slab = slab.at[H1P:H1P + H2, 0:H1].set(w2.T)             # w2^T  (20, 50)
    slab = slab.at[H1P:H1P + H2, H1P:H1P + 1].set(b2.T)      # b2    (20, 1)
    slab = slab.at[H1P:H1P + H2, H1P + 1:H1P + 2].set(w3)    # w3    (20, 1)
    slab = slab.at[H1P, H1P + 2].set(b3[0, 0])               # b3 scalar
    return slab


# ---------------------------------------------------------------------------
# Tiling / wrapper
# ---------------------------------------------------------------------------
def _choose_tiling(batch, *, tb_max=1024, min_steps=4):
    """Pick (tile_b, chunk, grid) for a given batch size."""
    steps = _cdiv(batch, tb_max)
    # Aim for >= 4 grid steps (2 per v7x TensorCore) when the batch allows,
    # without shrinking the tile below one 128-lane chunk.
    steps = max(steps, min(min_steps, _cdiv(batch, 128)))
    if steps > 1 and steps % 2:
        steps += 1                       # balanced halves under megacore split
    tile_b = _round_up(_cdiv(batch, steps), 128)
    grid = _cdiv(batch, tile_b)
    chunk = 256 if tile_b % 256 == 0 else 128
    return tile_b, chunk, grid


def _forward_fm_impl(x_fm, w_slab, tb_max):
    """Feature-major fused forward: x_fm (2, B) f32 -> (1, B) f32."""
    batch = x_fm.shape[1]
    tile_b, chunk, grid = _choose_tiling(batch, tb_max=tb_max)
    kernel = functools.partial(_mlp_kernel, chunk=chunk, n_chunks=tile_b // chunk)

    return pl.pallas_call(
        kernel,
        out_shape=jax.ShapeDtypeStruct((1, batch), jnp.float32),
        grid_spec=pltpu.PrefetchScalarGridSpec(
            num_scalar_prefetch=0,
            grid=(grid,),
            in_specs=[
                # x tile: pipelined / double-buffered; the ragged edge block is
                # handled by Pallas (in-bounds DMA, OOB lanes unspecified).
                pl.BlockSpec((IN_F, tile_b), lambda i: (0, i)),
                # packed weight slab: constant index_map -> VMEM resident.
                pl.BlockSpec((SLAB_ROWS, SLAB_COLS), lambda i: (0, 0)),
            ],
            # lane-dense output block; OOB lanes of the edge block are dropped
            # on writeback (padded columns hold garbage by design).
            out_specs=pl.BlockSpec((1, tile_b), lambda i: (0, i)),
        ),
        compiler_params=pltpu.CompilerParams(
            dimension_semantics=("parallel",),   # megacore sharding on v7x
        ),
    )(x_fm, w_slab)


@functools.partial(jax.jit, static_argnames=("tb_max",))
def net_forward_fm(x_fm, w_slab, *, tb_max=1024):
    """Fast path: feature-major in/out, zero wrapper re-layout."""
    return _forward_fm_impl(x_fm, w_slab, tb_max)


@functools.partial(jax.jit, static_argnames=("tb_max",))
def net_forward(x, w_slab, *, tb_max=1024):
    """Torch-compatible layout: x (B, 2) -> (B, 1).  Pure layout plumbing
    (two transposes) around the feature-major fast path."""
    return _forward_fm_impl(x.T, w_slab, tb_max).T


# ---------------------------------------------------------------------------
# Reference / init
# ---------------------------------------------------------------------------
def init_params(key):
    """Mirrors PyTorch nn.Linear default init: U(-1/sqrt(fan_in), +1/sqrt(fan_in)).

    Weights stored as (in_features, out_features); biases as (1, out_features).
    """
    dims = [(IN_F, H1), (H1, H2), (H2, 1)]
    params = []
    for (fan_in, fan_out) in dims:
        key, kw, kb = jax.random.split(key, 3)
        bound = 1.0 / jnp.sqrt(float(fan_in))
        w = jax.random.uniform(kw, (fan_in, fan_out), jnp.float32, -bound, bound)
        b = jax.random.uniform(kb, (1, fan_out), jnp.float32, -bound, bound)
        params.extend([w, b])
    return tuple(params)


def reference_forward(x, params):
    """Plain-JAX reference (same math as torch's nn.Sequential)."""
    w1, b1, w2, b2, w3, b3 = params
    h1 = jnp.maximum(x @ w1 + b1, 0.0)
    h2 = jnp.maximum(h1 @ w2 + b2, 0.0)
    return h2 @ w3 + b3


# ---------------------------------------------------------------------------
# Demo / correctness check
# ---------------------------------------------------------------------------
if __name__ == "__main__":
    key = jax.random.PRNGKey(0)
    key, kx1, kx2 = jax.random.split(key, 3)

    params = init_params(key)
    w_slab = pack_params(params)

    # Small batch (single grid step, ragged edge block), feature-major fast path.
    b_small = 8
    x_small_fm = jax.random.normal(kx1, (IN_F, b_small), dtype=jnp.float32)
    out_small = jax.block_until_ready(net_forward_fm(x_small_fm, w_slab))
    ref_small = reference_forward(x_small_fm.T, params)              # (B, 1)
    assert out_small.shape == (1, b_small), out_small.shape
    assert jnp.allclose(out_small.T, ref_small, atol=1e-5, rtol=1e-5), \
        "small-batch mismatch vs reference"

    # Awkward batch: 4 grid steps (TB=640, chunk=128), Pallas-masked edge block,
    # exercised through the torch-layout compatibility wrapper.
    b_big = 2500
    x_big = jax.random.normal(kx2, (b_big, IN_F), dtype=jnp.float32)
    out_big = jax.block_until_ready(net_forward(x_big, w_slab))
    ref_big = reference_forward(x_big, params)
    assert out_big.shape == (b_big, 1), out_big.shape
    assert jnp.allclose(out_big, ref_big, atol=1e-5, rtol=1e-5), \
        "large-batch mismatch vs reference"

    print("KERNEL_OK")
</pallas_src>

<mosaic_0001>
module attributes {stable_mosaic.version = 11 : i64} {
  func.func @_mlp_kernel(%arg0: i32, %arg1: memref<2x128xf32, #tpu.memory_space<vmem>>, %arg2: memref<96x128xf32, #tpu.memory_space<vmem>>, %arg3: memref<1x128xf32, #tpu.memory_space<vmem>>) attributes {dimension_semantics = [#tpu.dimension_semantics<parallel>], iteration_bounds = array<i64: 1>, scalar_prefetch = 0 : i64, scratch_operands = 0 : i64, tpu.core_type = #tpu.core_type<tc>, window_params = [{transform_indices = @transform_0, window_bounds = array<i64: 2, 128>}, {pipeline_mode = #tpu.pipeline_mode<synchronous>, transform_indices = @transform_1, window_bounds = array<i64: 96, 128>}, {transform_indices = @transform_2, window_bounds = array<i64: 1, 128>}]} {
    %c0 = arith.constant 0 : index
    %c0_0 = arith.constant 0 : index
    %0 = vector.load %arg2[%c0, %c0_0] : memref<96x128xf32, #tpu.memory_space<vmem>>, vector<64x1xf32>
    %c0_1 = arith.constant 0 : index
    %c1 = arith.constant 1 : index
    %1 = vector.load %arg2[%c0_1, %c1] : memref<96x128xf32, #tpu.memory_space<vmem>>, vector<64x1xf32>
    %c0_2 = arith.constant 0 : index
    %c2 = arith.constant 2 : index
    %2 = vector.load %arg2[%c0_2, %c2] : memref<96x128xf32, #tpu.memory_space<vmem>>, vector<64x1xf32>
    %c64 = arith.constant 64 : index
    %c0_3 = arith.constant 0 : index
    %3 = vector.load %arg2[%c64, %c0_3] : memref<96x128xf32, #tpu.memory_space<vmem>>, vector<32x64xf32>
    %c64_4 = arith.constant 64 : index
    %c64_5 = arith.constant 64 : index
    %4 = vector.load %arg2[%c64_4, %c64_5] : memref<96x128xf32, #tpu.memory_space<vmem>>, vector<32x1xf32>
    %c64_6 = arith.constant 64 : index
    %c65 = arith.constant 65 : index
    %5 = vector.load %arg2[%c64_6, %c65] : memref<96x128xf32, #tpu.memory_space<vmem>>, vector<32x1xf32>
    %c64_7 = arith.constant 64 : index
    %c66 = arith.constant 66 : index
    %6 = vector.load %arg2[%c64_7, %c66] : memref<96x128xf32, #tpu.memory_space<vmem>>, vector<1x1xf32>
    %c0_8 = arith.constant 0 : index
    %c0_9 = arith.constant 0 : index
    %7 = vector.load %arg1[%c0_8, %c0_9] : memref<2x128xf32, #tpu.memory_space<vmem>>, vector<1x128xf32>
    %c1_10 = arith.constant 1 : index
    %c0_11 = arith.constant 0 : index
    %8 = vector.load %arg1[%c1_10, %c0_11] : memref<2x128xf32, #tpu.memory_space<vmem>>, vector<1x128xf32>
    %9 = vector.broadcast %0 : vector<64x1xf32> to vector<64x128xf32>
    %10 = vector.broadcast %7 : vector<1x128xf32> to vector<64x128xf32>
    %11 = arith.mulf %9, %10 : vector<64x128xf32>
    %12 = vector.broadcast %1 : vector<64x1xf32> to vector<64x128xf32>
    %13 = vector.broadcast %8 : vector<1x128xf32> to vector<64x128xf32>
    %14 = arith.mulf %12, %13 : vector<64x128xf32>
    %15 = arith.addf %11, %14 : vector<64x128xf32>
    %16 = vector.broadcast %2 : vector<64x1xf32> to vector<64x128xf32>
    %17 = arith.addf %15, %16 : vector<64x128xf32>
    %cst = arith.constant 0.000000e+00 : f32
    %18 = vector.broadcast %cst : f32 to vector<64x128xf32>
    %19 = arith.maximumf %17, %18 : vector<64x128xf32>
    %cst_12 = arith.constant dense<0.000000e+00> : vector<32x128xf32>
    %20 = tpu.matmul %3, %19, %cst_12 {dimension_numbers = #tpu.dot_dimension_numbers<[1], [0], [0], [1], [0, 0, 1, 1], [], []>} : vector<32x64xf32>, vector<64x128xf32>, vector<32x128xf32> -> vector<32x128xf32>
    %21 = vector.broadcast %4 : vector<32x1xf32> to vector<32x128xf32>
    %22 = arith.addf %20, %21 : vector<32x128xf32>
    %cst_13 = arith.constant 0.000000e+00 : f32
    %23 = vector.broadcast %cst_13 : f32 to vector<32x128xf32>
    %24 = arith.maximumf %22, %23 : vector<32x128xf32>
    %25 = vector.broadcast %5 : vector<32x1xf32> to vector<32x128xf32>
    %26 = arith.mulf %25, %24 : vector<32x128xf32>
    %cst_14 = arith.constant dense<0.000000e+00> : vector<128xf32>
    %27 = vector.multi_reduction <add>, %26, %cst_14 [0] : vector<32x128xf32> to vector<128xf32>
    %28 = vector.shape_cast %27 : vector<128xf32> to vector<1x128xf32>
    %29 = vector.broadcast %6 : vector<1x1xf32> to vector<1x128xf32>
    %30 = arith.addf %28, %29 : vector<1x128xf32>
    %c0_15 = arith.constant 0 : index
    %c0_16 = arith.constant 0 : index
    %31 = vector.load %arg3[%c0_15, %c0_16] : memref<1x128xf32, #tpu.memory_space<vmem>>, vector<1x128xf32>
    tpu.vector_store %arg3[%c0_15, %c0_16], %30 {strides = array<i32>} : memref<1x128xf32, #tpu.memory_space<vmem>>, vector<1x128xf32>,
    return
  }
  func.func @transform_0(%arg0: i32) -> (i32, i32) {
    %c0_i32 = arith.constant 0 : i32
    %c0_i32_0 = arith.constant 0 : i32
    return %c0_i32, %arg0 : i32, i32
  }
  func.func @transform_1(%arg0: i32) -> (i32, i32) {
    %c0_i32 = arith.constant 0 : i32
    %c0_i32_0 = arith.constant 0 : i32
    %c0_i32_1 = arith.constant 0 : i32
    return %c0_i32, %c0_i32_0 : i32, i32
  }
  func.func @transform_2(%arg0: i32) -> (i32, i32) {
    %c0_i32 = arith.constant 0 : i32
    %c0_i32_0 = arith.constant 0 : i32
    return %c0_i32, %arg0 : i32, i32
  }
}

</mosaic_0001>

<llo_original>
// kernel: net_forward_fm.1
$region0: #{net_forward_fm.1}
  #allocation0 [shape = 'u32[]', space=smem, size = 0x4, offset = 0x4, fixed_abs, tag = 'smem constant byte address 0x4 - core index']
  #allocation1 [shape = 'u32[72,128]{1,0:T(1,128)}', space=vmem, size = 0x9000, scoped, tag = 'internal scratch']
  %s0 = inlined_call_operand.hbm [shape: f32[2,8], index: 0, kind: input, shape index: {}]
  %s1 = inlined_call_operand.hbm [shape: f32[96,128], index: 1, kind: input, shape index: {}]
  %s2 = inlined_call_operand.hbm [shape: f32[1,8], index: 2, kind: output, shape index: {}]
  %s3 = sld [smem:[#allocation0]]
  $region26: #{net_forward_fm.1} parent=0
    _
  %s5 = ssub.s32 1, %s3
  %s6 = scalar_select 0, %s5, %s3
  $region1: #{net_forward_fm.1} parent=0
    #allocation2 [shape = 'u8[1024]{0}', space=vmem, size = 0x400, scoped, tag = 'input window, operand 0, single buffered']
    #allocation3 [shape = 's32[1]{0}', space=sflag, size = 0x4, scoped, tag = 'scoped memory for net_forward_fm.1']
    #allocation4 [shape = 's32[1]{0}', space=sflag, size = 0x4, scoped, tag = 'scoped memory for net_forward_fm.1']
    #allocation5 [shape = 'u8[49152]{0}', space=vmem, size = 0xc000, scoped, tag = 'input window, operand 1, single buffered']
    #allocation6 [shape = 's32[1]{0}', space=sflag, size = 0x4, scoped, tag = 'scoped memory for net_forward_fm.1']
    #allocation7 [shape = 'u8[512]{0}', space=vmem, size = 0x400, scoped, tag = 'output window, operand 0, single buffered']
    %7 = vsyncpa [#allocation3], 0
    %8 = vsyncpa [#allocation6], 0
    %9 = vsyncpa [#allocation4], 0
    // Predicated region
    $region2: #{net_forward_fm.1} parent=1 // pred_check
      _
    $region3: #{net_forward_fm.1} parent=1 // pred_check_branch
      %11 = sbr.rel (0) target = $region5
    $region4: #{net_forward_fm.1} parent=1 // pred_region
      %13 = vsyncadd [#allocation3], 0
      %s15 = sshll.u32 %s0, 4
      %s16 = int_to_ptr.hbm [resolvable:$true] %s15
      %s17 = sshll.u32 [#allocation2], 4
      %s18 = int_to_ptr.vmem [resolvable:$true] %s17
      %20 = dma.hbm_to_vmem [thread:$0]  %s16, 32, %s18, [#allocation3]
    $region5: #{net_forward_fm.1} parent=1 // pred_fallthru
      _
    // Predicated region
    $region6: #{net_forward_fm.1} parent=1 // pred_check
      _
    $region7: #{net_forward_fm.1} parent=1 // pred_check_branch
      %22 = sbr.rel (0) target = $region9
    $region8: #{net_forward_fm.1} parent=1 // pred_region
      %24 = vsyncadd [#allocation6], 0
      %s25 = sshll.u32 %s1, 4
      %s26 = int_to_ptr.hbm [resolvable:$true] %s25
      %s27 = sshll.u32 [#allocation5], 4
      %s28 = int_to_ptr.vmem [resolvable:$true] %s27
      %33 = dma.hbm_to_vmem [thread:$0]  %s26, 1536, %s28, [#allocation6], 128, 128, 8
    $region9: #{net_forward_fm.1} parent=1 // pred_fallthru
      _
    // Predicated region
    $region10: #{net_forward_fm.1} parent=1 // pred_check
      _
    $region11: #{net_forward_fm.1} parent=1 // pred_check_branch
      %35 = sbr.rel (0) target = $region13
    $region12: #{net_forward_fm.1} parent=1 // pred_region
      %37 = dma.done [#allocation3], 32
    $region13: #{net_forward_fm.1} parent=1 // pred_fallthru
      _
    // Predicated region
    $region14: #{net_forward_fm.1} parent=1 // pred_check
      _
    $region15: #{net_forward_fm.1} parent=1 // pred_check_branch
      %39 = sbr.rel (0) target = $region17
    $region16: #{net_forward_fm.1} parent=1 // pred_region
      %41 = dma.done [#allocation6], 1536
    $region17: #{net_forward_fm.1} parent=1 // pred_fallthru
      _
    %v42 = vld [vmem:[#allocation5] sm:$0xff]
    %v43 = vld [vmem:[#allocation5 + $0x8] sm:$0xff]
    %v44 = vld [vmem:[#allocation5 + $0x10] sm:$0xff]
    %v45 = vld [vmem:[#allocation5 + $0x18] sm:$0xff]
    %v46 = vld [vmem:[#allocation5 + $0x20] sm:$0xff]
    %v47 = vld [vmem:[#allocation5 + $0x28] sm:$0xff]
    %v48 = vld [vmem:[#allocation5 + $0x30] sm:$0xff]
    %v49 = vld [vmem:[#allocation5 + $0x38] sm:$0xff]
    %v50 = vld [vmem:[#allocation5 + $0x40] sm:$0xff]
    %v51 = vld [vmem:[#allocation5 + $0x48] sm:$0xff]
    %v52 = vld [vmem:[#allocation5 + $0x50] sm:$0xff]
    %v53 = vld [vmem:[#allocation5 + $0x58] sm:$0xff]
    %v54 = vld [vmem:[#allocation5 + $0x40] sm:$0x1]
    %v55 = vld [vmem:[#allocation2] sm:$0x1]
    %v56 = vld [vmem:[#allocation2 + $0x1] sm:$0x1]
    %58 = vset.pattern.permute.xlu0 0
    %59 = vperm.xlu0 %58, %v42
    %v60 = vpop.permute.xlu0 %59
    %63 = vset.pattern.permute.xlu0 0
    %64 = vperm.xlu0 %63, %v43
    %v65 = vpop.permute.xlu0 %64
    %68 = vset.pattern.permute.xlu0 0
    %69 = vperm.xlu0 %68, %v44
    %v70 = vpop.permute.xlu0 %69
    %73 = vset.pattern.permute.xlu0 0
    %74 = vperm.xlu0 %73, %v45
    %v75 = vpop.permute.xlu0 %74
    %78 = vset.pattern.permute.xlu0 0
    %79 = vperm.xlu0 %78, %v46
    %v80 = vpop.permute.xlu0 %79
    %83 = vset.pattern.permute.xlu0 0
    %84 = vperm.xlu0 %83, %v47
    %v85 = vpop.permute.xlu0 %84
    %88 = vset.pattern.permute.xlu0 0
    %89 = vperm.xlu0 %88, %v48
    %v90 = vpop.permute.xlu0 %89
    %93 = vset.pattern.permute.xlu0 0
    %94 = vperm.xlu0 %93, %v49
    %v95 = vpop.permute.xlu0 %94
    %v97 = vperm.slane %v55, 0
    %v98 = vmul.f32 %v60, %v97
    %v99 = vmul.f32 %v65, %v97
    %v100 = vmul.f32 %v70, %v97
    %v101 = vmul.f32 %v75, %v97
    %v102 = vmul.f32 %v80, %v97
    %v103 = vmul.f32 %v85, %v97
    %v104 = vmul.f32 %v90, %v97
    %v105 = vmul.f32 %v95, %v97
    %106 = vset.pattern.permute.xlu0 1
    %107 = vperm.xlu0 %106, %v42
    %v108 = vpop.permute.xlu0 %107
    %110 = vset.pattern.permute.xlu0 1
    %111 = vperm.xlu0 %110, %v43
    %v112 = vpop.permute.xlu0 %111
    %114 = vset.pattern.permute.xlu0 1
    %115 = vperm.xlu0 %114, %v44
    %v116 = vpop.permute.xlu0 %115
    %118 = vset.pattern.permute.xlu0 1
    %119 = vperm.xlu0 %118, %v45
    %v120 = vpop.permute.xlu0 %119
    %122 = vset.pattern.permute.xlu0 1
    %123 = vperm.xlu0 %122, %v46
    %v124 = vpop.permute.xlu0 %123
    %126 = vset.pattern.permute.xlu0 1
    %127 = vperm.xlu0 %126, %v47
    %v128 = vpop.permute.xlu0 %127
    %130 = vset.pattern.permute.xlu0 1
    %131 = vperm.xlu0 %130, %v48
    %v132 = vpop.permute.xlu0 %131
    %134 = vset.pattern.permute.xlu0 1
    %135 = vperm.xlu0 %134, %v49
    %v136 = vpop.permute.xlu0 %135
    %v138 = vperm.slane %v56, 0
    %v139 = vmul.f32 %v108, %v138
    %v140 = vmul.f32 %v112, %v138
    %v141 = vmul.f32 %v116, %v138
    %v142 = vmul.f32 %v120, %v138
    %v143 = vmul.f32 %v124, %v138
    %v144 = vmul.f32 %v128, %v138
    %v145 = vmul.f32 %v132, %v138
    %v146 = vmul.f32 %v136, %v138
    %v147 = vadd.f32 %v98, %v139
    %v148 = vadd.f32 %v99, %v140
    %v149 = vadd.f32 %v100, %v141
    %v150 = vadd.f32 %v101, %v142
    %v151 = vadd.f32 %v102, %v143
    %v152 = vadd.f32 %v103, %v144
    %v153 = vadd.f32 %v104, %v145
    %v154 = vadd.f32 %v105, %v146
    %155 = vset.pattern.permute.xlu0 2
    %156 = vperm.xlu0 %155, %v42
    %v157 = vpop.permute.xlu0 %156
    %159 = vset.pattern.permute.xlu0 2
    %160 = vperm.xlu0 %159, %v43
    %v161 = vpop.permute.xlu0 %160
    %163 = vset.pattern.permute.xlu0 2
    %164 = vperm.xlu0 %163, %v44
    %v165 = vpop.permute.xlu0 %164
    %167 = vset.pattern.permute.xlu0 2
    %168 = vperm.xlu0 %167, %v45
    %v169 = vpop.permute.xlu0 %168
    %171 = vset.pattern.permute.xlu0 2
    %172 = vperm.xlu0 %171, %v46
    %v173 = vpop.permute.xlu0 %172
    %175 = vset.pattern.permute.xlu0 2
    %176 = vperm.xlu0 %175, %v47
    %v177 = vpop.permute.xlu0 %176
    %179 = vset.pattern.permute.xlu0 2
    %180 = vperm.xlu0 %179, %v48
    %v181 = vpop.permute.xlu0 %180
    %183 = vset.pattern.permute.xlu0 2
    %184 = vperm.xlu0 %183, %v49
    %v185 = vpop.permute.xlu0 %184
    %v187 = vadd.f32 %v147, %v157
    %v188 = vadd.f32 %v148, %v161
    %v189 = vadd.f32 %v149, %v165
    %v190 = vadd.f32 %v150, %v169
    %v191 = vadd.f32 %v151, %v173
    %v192 = vadd.f32 %v152, %v177
    %v193 = vadd.f32 %v153, %v181
    %v194 = vadd.f32 %v154, %v185
    %v195 = vmax.f32 %v187, 0.0
    %v196 = vmax.f32 %v188, 0.0
    %v197 = vmax.f32 %v189, 0.0
    %v198 = vmax.f32 %v190, 0.0
    %v199 = vmax.f32 %v191, 0.0
    %v200 = vmax.f32 %v192, 0.0
    %v201 = vmax.f32 %v193, 0.0
    %v202 = vmax.f32 %v194, 0.0
    %204 = vset.pattern.permute.xlu0 64
    %205 = vperm.xlu0 %204, %v50
    %v206 = vpop.permute.xlu0 %205
    %209 = vset.pattern.permute.xlu0 64
    %210 = vperm.xlu0 %209, %v51
    %v211 = vpop.permute.xlu0 %210
    %214 = vset.pattern.permute.xlu0 64
    %215 = vperm.xlu0 %214, %v52
    %v216 = vpop.permute.xlu0 %215
    %219 = vset.pattern.permute.xlu0 64
    %220 = vperm.xlu0 %219, %v53
    %v221 = vpop.permute.xlu0 %220
    %vm223 = vcmask 523264
    %v224 = vsel %vm223, %v50, 0
    %v226 = vsel %vm223, %v51, 0
    %v228 = vsel %vm223, %v52, 0
    %v230 = vsel %vm223, %v53, 0
    %232 = vmatpush.msra.mxu0 0.0
    %233 = vmatpush.msra.mxu0 0.0
    %234 = vmatpush.msra.mxu0 0.0
    %235 = vmatpush.msra.mxu0 0.0
    %236 = vmatpush.msra.mxu0 0.0
    %237 = vmatpush.msra.mxu0 0.0
    %238 = vmatpush.msra.mxu0 0.0
    %239 = vmatpush.msra.mxu0 0.0
    %240 = vmatpush.msra.mxu0 %v202
    %241 = vmatpush.msra.mxu0 %v201
    %242 = vmatpush.msra.mxu0 %v200
    %243 = vmatpush.msra.mxu0 %v199
    %244 = vmatpush.msra.mxu0 %v198
    %245 = vmatpush.msra.mxu0 %v197
    %246 = vmatpush.msra.mxu0 %v196
    %247 = vmatpush.msra.mxu0 %v195
    %248 = vmatmul.f32.gmra.mxu0 %v224
    %v249 = vpop.f32.mrf.mxu0
    %v250 = vadd.f32 %v206, %v249
    %251 = vmatmul.f32.gmra.mxu0 %v226
    %v252 = vpop.f32.mrf.mxu0
    %v253 = vadd.f32 %v211, %v252
    %254 = vmatmul.f32.gmra.mxu0 %v228
    %v255 = vpop.f32.mrf.mxu0
    %v256 = vadd.f32 %v216, %v255
    %257 = vmatmul.f32.gmra.mxu0 %v230
    %v258 = vpop.f32.mrf.mxu0
    %v259 = vadd.f32 %v221, %v258
    %260 = vdwg.mxu0
    %v261 = vmax.f32 %v250, 0.0
    %v262 = vmax.f32 %v253, 0.0
    %v263 = vmax.f32 %v256, 0.0
    %v264 = vmax.f32 %v259, 0.0
    %265 = vset.pattern.permute.xlu0 65
    %266 = vperm.xlu0 %265, %v50
    %v267 = vpop.permute.xlu0 %266
    %269 = vset.pattern.permute.xlu0 65
    %270 = vperm.xlu0 %269, %v51
    %v271 = vpop.permute.xlu0 %270
    %273 = vset.pattern.permute.xlu0 65
    %274 = vperm.xlu0 %273, %v52
    %v275 = vpop.permute.xlu0 %274
    %277 = vset.pattern.permute.xlu0 65
    %278 = vperm.xlu0 %277, %v53
    %v279 = vpop.permute.xlu0 %278
    %v281 = vmul.f32 %v267, %v261
    %v282 = vmul.f32 %v271, %v262
    %v283 = vmul.f32 %v275, %v263
    %v284 = vmul.f32 %v279, %v264
    %v285 = vadd.f32 %v281, %v282
    %v286 = vadd.f32 %v285, %v283
    %v287 = vadd.f32 %v286, %v284
    %v288 = vrot.slane %v287, 4
    %v289 = vadd.f32 %v287, %v288
    %v290 = vrot.slane %v289, 2
    %v291 = vadd.f32 %v289, %v290
    %v292 = vrot.slane %v291, 1
    %v293 = vadd.f32 %v291, %v292
    %295 = vset.pattern.permute.xlu0 66
    %296 = vperm.xlu0 %295, %v54
    %v297 = vpop.permute.xlu0 %296
    %v299 = vadd.f32 %v293, %v297
    %300 = vst [vmem:[#allocation7] sm:$0x1] %v299
    // Predicated region
    $region18: #{net_forward_fm.1} parent=1 // pred_check
      _
    $region19: #{net_forward_fm.1} parent=1 // pred_check_branch
      %302 = sbr.rel (0) target = $region21
    $region20: #{net_forward_fm.1} parent=1 // pred_region
      %304 = vsyncadd [#allocation4], 0
      %s306 = sshll.u32 [#allocation7], 4
      %s307 = int_to_ptr.vmem [resolvable:$true] %s306
      %s308 = sshll.u32 %s2, 4
      %s309 = int_to_ptr.hbm [resolvable:$true] %s308
      %311 = dma.vmem_to_hbm [thread:$0]  %s307, 16, %s309, [#allocation4]
    $region21: #{net_forward_fm.1} parent=1 // pred_fallthru
      _
    // Predicated region
    $region22: #{net_forward_fm.1} parent=1 // pred_check
      _
    $region23: #{net_forward_fm.1} parent=1 // pred_check_branch
      %313 = sbr.rel (0) target = $region25
    $region24: #{net_forward_fm.1} parent=1 // pred_region
      %315 = dma.done [#allocation4], 16
    $region25: #{net_forward_fm.1} parent=1 // pred_fallthru
      _
    %316 = vsyncpa [#allocation3], 1
    %317 = vsyncpa [#allocation6], 1
    %318 = vsyncpa [#allocation4], 1

</llo_original>
